<compile_context>
chip_gen: v6e
topology: v6e:2x2x1
jax: 0.10.0
libtpu: 0.0.40
codegen_flags: <defaults>
</compile_context>

<pallas_src>
from functools import partial

import jax
import jax.numpy as jnp
from jax import lax
from jax.experimental import pallas as pl
from jax.experimental.pallas import tpu as pltpu


@partial(jax.jit, static_argnames=("batch", "b_pad", "e_true"))
def _policy_forward(key, b_refl, w_emb_pad, b_emb_pad, *, batch, b_pad, e_true):
    """Fused text_embedding Linear + (folded) reflection head + batch mean."""
    hidden, e_pad = w_emb_pad.shape

    # Mock embeddings (torch.randn equivalent). Drawn OUTSIDE the kernel because
    # pltpu.prng_* cannot lower on the CPU/interpret path; under jit this fuses
    # into the same program. Padded batch rows carry random values but are
    # masked out of the score below and never exposed as true embeddings.
    x = jax.random.normal(key, (b_pad, hidden), jnp.float32).astype(jnp.bfloat16)

    def kernel(brefl_ref, x_ref, w_ref, be_ref, emb_ref, score_ref):
        # text_embedding Linear (+ fused reflection-head column at lane e_true):
        # bf16 MXU operands, f32 accumulation; epilogue stays f32 (v5e-safe).
        emb = jnp.dot(x_ref[...], w_ref[...],
                      preferred_element_type=jnp.float32) + be_ref[...]
        emb_ref[...] = emb                                    # (b_pad, e_pad) lane-dense

        # reflection_head output is already lane e_true of the fused matmul.
        z = emb[:, e_true:e_true + 1]                         # (b_pad, 1)
        row = lax.broadcasted_iota(jnp.int32, (b_pad, 1), 0)
        z = jnp.where(row < batch, z, 0.0)                    # drop padded batch rows
        # mean over the true batch + head bias; single scalar store to SMEM.
        score_ref[0, 0] = jnp.sum(z) * jnp.float32(1.0 / batch) + brefl_ref[0]

    emb_pad, score = pl.pallas_call(
        kernel,
        out_shape=(
            jax.ShapeDtypeStruct((b_pad, e_pad), jnp.float32),
            jax.ShapeDtypeStruct((1, 1), jnp.float32),
        ),
        in_specs=[
            pl.BlockSpec(memory_space=pltpu.SMEM),   # reflection-head bias (1,) f32
            pl.BlockSpec(memory_space=pltpu.VMEM),   # x      (b_pad, H)  bf16
            pl.BlockSpec(memory_space=pltpu.VMEM),   # W_emb  (H, E_pad)  bf16 (+fused head col)
            pl.BlockSpec(memory_space=pltpu.VMEM),   # b_emb  (1, E_pad)  f32  (+fused head col)
        ],
        out_specs=(
            pl.BlockSpec(memory_space=pltpu.VMEM),   # emb (padded, lane-dense)
            pl.BlockSpec(memory_space=pltpu.SMEM),   # score scalar
        ),
        # TODO(synk): if H/E scale to real-model sizes, whole-weights-in-VMEM breaks
        # first on v7x's 64 MiB VMEM; at that point add a K-tiled grid with
        # pl.Buffered(2) and pltpu.CompilerParams(vmem_limit_bytes=...). Unnecessary
        # at policy-head sizes.
    )(b_refl, x, w_emb_pad, b_emb_pad)

    s = score[0, 0]
    return emb_pad, s, s < jnp.float32(0.5)


def make_params(hidden_size, embedding_size, key):
    """Deterministic synthetic parameters in kernel-friendly padded layout.

    Column `embedding_size` of the padded weight/bias carries the reflection
    head folded into the embedding matmul; remaining padded columns are zero.
    """
    e_pad = max(128, -(-(embedding_size + 1) // 128) * 128)
    k1, k2, k3, k4 = jax.random.split(key, 4)
    # nn.Linear(hidden_size, embedding_size) -> stored transposed (H, E)
    w_emb = jax.random.normal(k1, (hidden_size, embedding_size), jnp.float32) / jnp.sqrt(
        jnp.float32(hidden_size))
    b_emb = jax.random.normal(k2, (1, embedding_size), jnp.float32) * 0.01
    # reflection_head ~ nn.Linear(embedding_size, 1)
    w_refl = jax.random.normal(k3, (embedding_size,), jnp.float32) / jnp.sqrt(
        jnp.float32(embedding_size))
    b_refl = jax.random.normal(k4, (1,), jnp.float32) * 0.01

    # Fold the head into the matmul: emb[:, E] = x @ (W_emb @ w_refl) + b_emb . w_refl
    w_fused = w_emb @ w_refl                       # (H,)
    b_fused = jnp.dot(b_emb[0], w_refl)            # scalar

    w_emb_pad = jnp.zeros((hidden_size, e_pad), jnp.bfloat16)
    w_emb_pad = w_emb_pad.at[:, :embedding_size].set(w_emb.astype(jnp.bfloat16))
    w_emb_pad = w_emb_pad.at[:, embedding_size].set(w_fused.astype(jnp.bfloat16))
    b_emb_pad = jnp.zeros((1, e_pad), jnp.float32)
    b_emb_pad = b_emb_pad.at[:, :embedding_size].set(b_emb)
    b_emb_pad = b_emb_pad.at[0, embedding_size].set(b_fused)
    return w_emb_pad, b_emb_pad, b_refl


def should_reflect(current_output, params, key, embedding_size):
    """ReflectivePolicy.should_reflect: mock embeddings -> head -> mean < 0.5.

    Returns device arrays (emb_pad, score, reflect); no host sync here.
    """
    w_emb_pad, b_emb_pad, b_refl = params
    batch = len(current_output) if isinstance(current_output, (list, tuple)) else 1
    b_pad = max(8, -(-batch // 8) * 8)       # fill the 8 sublanes of a vreg
    return _policy_forward(key, b_refl, w_emb_pad, b_emb_pad,
                           batch=batch, b_pad=b_pad, e_true=embedding_size)


def generate_reflection(question, current_path, current_output):
    return [
        "The previous reasoning step was incorrect.",
        "Let's correct it with the following steps:",
    ]


if __name__ == "__main__":
    # Small shapes consistent with the module (defaults H=768, E=10; H scaled down).
    hidden_size = 128
    embedding_size = 10

    key = jax.random.PRNGKey(0)
    kp, kx = jax.random.split(key)
    params = make_params(hidden_size, embedding_size, kp)

    # Pretend the base model produced 4 candidate reasoning steps.
    base_output = [f"Step {i}: reasoning text" for i in range(4)]

    emb_pad, score, reflect = should_reflect(base_output, params, kx, embedding_size)
    jax.block_until_ready((emb_pad, score, reflect))

    # forward(): the single host readback happens only where the Python-level
    # string branch actually needs it (deferred sync per perf review).
    out = (generate_reflection("q", [], base_output) + base_output) if bool(reflect) else base_output

    emb = emb_pad[:len(base_output), :embedding_size]   # test-only view of the true embeddings
    assert emb.shape == (len(base_output), embedding_size)
    assert score.shape == ()
    assert isinstance(out, list)

    print("KERNEL_OK")
</pallas_src>

<mosaic_0001>
module attributes {stable_mosaic.version = 11 : i64} {
  func.func @kernel(%arg0: memref<1xf32, #tpu.memory_space<smem>>, %arg1: memref<8x128xbf16, #tpu.memory_space<vmem>>, %arg2: memref<128x128xbf16, #tpu.memory_space<vmem>>, %arg3: memref<1x128xf32, #tpu.memory_space<vmem>>, %arg4: memref<8x128xf32, #tpu.memory_space<vmem>>, %arg5: memref<1x1xf32, #tpu.memory_space<smem>>) attributes {dimension_semantics = [], scalar_prefetch = 0 : i64, scratch_operands = 0 : i64, tpu.core_type = #tpu.core_type<tc>} {
    %c0 = arith.constant 0 : index
    %c0_0 = arith.constant 0 : index
    %0 = vector.load %arg1[%c0, %c0_0] : memref<8x128xbf16, #tpu.memory_space<vmem>>, vector<8x128xbf16>
    %c0_1 = arith.constant 0 : index
    %c0_2 = arith.constant 0 : index
    %1 = vector.load %arg2[%c0_1, %c0_2] : memref<128x128xbf16, #tpu.memory_space<vmem>>, vector<128x128xbf16>
    %cst = arith.constant dense<0.000000e+00> : vector<8x128xf32>
    %2 = tpu.matmul %0, %1, %cst {dimension_numbers = #tpu.dot_dimension_numbers<[1], [0], [0], [1], [0, 0, 1, 1], [], []>} : vector<8x128xbf16>, vector<128x128xbf16>, vector<8x128xf32> -> vector<8x128xf32>
    %c0_3 = arith.constant 0 : index
    %c0_4 = arith.constant 0 : index
    %3 = vector.load %arg3[%c0_3, %c0_4] : memref<1x128xf32, #tpu.memory_space<vmem>>, vector<1x128xf32>
    %4 = vector.broadcast %3 : vector<1x128xf32> to vector<8x128xf32>
    %5 = arith.addf %2, %4 : vector<8x128xf32>
    %c0_5 = arith.constant 0 : index
    %c0_6 = arith.constant 0 : index
    %6 = vector.load %arg4[%c0_5, %c0_6] : memref<8x128xf32, #tpu.memory_space<vmem>>, vector<8x128xf32>
    tpu.vector_store %arg4[%c0_5, %c0_6], %5 {strides = array<i32>} : memref<8x128xf32, #tpu.memory_space<vmem>>, vector<8x128xf32>,
    %7 = vector.extract_strided_slice %5 {offsets = [0, 10], sizes = [8, 1], strides = [1, 1]} : vector<8x128xf32> to vector<8x1xf32>
    %8 = tpu.iota {dimensions = array<i32: 0>} : vector<8x1xi32>
    %c4_i32 = arith.constant 4 : i32
    %9 = vector.broadcast %c4_i32 : i32 to vector<8x1xi32>
    %10 = arith.cmpi slt, %8, %9 : vector<8x1xi32>
    %cst_7 = arith.constant 0.000000e+00 : f32
    %11 = vector.broadcast %cst_7 : f32 to vector<8x1xf32>
    %12 = arith.select %10, %7, %11 : vector<8x1xi1>, vector<8x1xf32>
    %13 = vector.shape_cast %12 : vector<8x1xf32> to vector<1x8x1xf32>
    %cst_8 = arith.constant dense<0.000000e+00> : vector<1xf32>
    %14 = vector.multi_reduction <add>, %13, %cst_8 [1, 2] : vector<1x8x1xf32> to vector<1xf32>
    %15 = vector.shape_cast %14 : vector<1xf32> to vector<1x1x1xf32>
    %16 = vector.extract %15[0, 0, 0] : f32 from vector<1x1x1xf32>
    %cst_9 = arith.constant 2.500000e-01 : f32
    %17 = arith.mulf %16, %cst_9 : f32
    %c0_10 = arith.constant 0 : index
    %18 = memref.load %arg0[%c0_10] : memref<1xf32, #tpu.memory_space<smem>>
    %19 = arith.addf %17, %18 : f32
    %c0_11 = arith.constant 0 : index
    %c0_12 = arith.constant 0 : index
    %20 = memref.load %arg5[%c0_11, %c0_12] : memref<1x1xf32, #tpu.memory_space<smem>>
    memref.store %19, %arg5[%c0_11, %c0_12] : memref<1x1xf32, #tpu.memory_space<smem>>
    return
  }
}

</mosaic_0001>

<llo_original>
// kernel: _policy_forward.1
$region0: #{_policy_forward.1}
  #allocation0 [shape = 'u32[]', space=smem, size = 0x4, offset = 0x4, fixed_abs, tag = 'smem constant byte address 0x4 - core index']
  #allocation1 [shape = 'u32[144,128]{1,0:T(1,128)}', space=vmem, size = 0x12000, scoped, tag = 'internal scratch']
  #allocation2 [shape = 'f32[1]{0:T(128)S(6)}', space=smem, size = 0x200, scoped, tag = 'scoped memory for _policy_forward.1']
  %s0 = inlined_call_operand.<no memory space> [shape: f32[1], index: 0, kind: input, shape index: {}]
  %s1 = inlined_call_operand.vmem [shape: bf16[8,128], index: 1, kind: input, shape index: {}]
  %s2 = inlined_call_operand.hbm [shape: bf16[128,128], index: 2, kind: input, shape index: {}]
  %s3 = inlined_call_operand.vmem [shape: f32[1,128], index: 3, kind: input, shape index: {}]
  %s4 = inlined_call_operand.hbm [shape: f32[8,128], index: 4, kind: output, shape index: {0}]
  %s5 = inlined_call_operand.hbm [shape: f32[1,1], index: 5, kind: output, shape index: {1}]
  %6 = xla_tuple %s4, %s5
  %s7 = sld [smem:[#allocation0]]
  $region38: #{_policy_forward.1} parent=0
    _
  %s9 = ssub.s32 1, %s7
  %s10 = scalar_select 0, %s9, %s7
  %11 = sst [smem:[#allocation2]] %s0
  $region1: #{_policy_forward.1} parent=0
    #allocation3 [shape = 'u8[32768]{0}', space=vmem, size = 0x8000, scoped, tag = 'input window, operand 2, single buffered']
    #allocation4 [shape = 's32[1]{0}', space=sflag, size = 0x4, scoped, tag = 'scoped memory for _policy_forward.1']
    #allocation5 [shape = 's32[1]{0}', space=sflag, size = 0x4, scoped, tag = 'scoped memory for _policy_forward.1']
    #allocation6 [shape = 's32[1]{0}', space=sflag, size = 0x4, scoped, tag = 'scoped memory for _policy_forward.1']
    #allocation7 [shape = 'u8[4096]{0}', space=vmem, size = 0x1000, scoped, tag = 'output window, operand 0, single buffered']
    #allocation8 [shape = 'u8[512]{0}', space=smem, size = 0x200, scoped, tag = 'output window, operand 1, single buffered']
    %12 = vsyncpa [#allocation4], 0
    %13 = vsyncpa [#allocation5], 0
    %14 = vsyncpa [#allocation6], 0
    // Predicated region
    $region2: #{_policy_forward.1} parent=1 // pred_check
      _
    $region3: #{_policy_forward.1} parent=1 // pred_check_branch
      %16 = sbr.rel (0) target = $region5
    $region4: #{_policy_forward.1} parent=1 // pred_region
      _
    $region5: #{_policy_forward.1} parent=1 // pred_fallthru
      _
    // Predicated region
    $region6: #{_policy_forward.1} parent=1 // pred_check
      _
    $region7: #{_policy_forward.1} parent=1 // pred_check_branch
      %18 = sbr.rel (0) target = $region9
    $region8: #{_policy_forward.1} parent=1 // pred_region
      _
    $region9: #{_policy_forward.1} parent=1 // pred_fallthru
      _
    // Predicated region
    $region10: #{_policy_forward.1} parent=1 // pred_check
      _
    $region11: #{_policy_forward.1} parent=1 // pred_check_branch
      %20 = sbr.rel (0) target = $region13
    $region12: #{_policy_forward.1} parent=1 // pred_region
      %s22 = ssub.s32 1024, 1024
      %23 = vsyncadd [#allocation4], %s22
      %s24 = sshll.u32 [#allocation3], 4
      %s25 = int_to_ptr.vmem [resolvable:$true] %s24
      %30 = dma.hbm_to_vmem [thread:$0]  %s2, 1024, %s25, [#allocation4], 64, 64, 4
    $region13: #{_policy_forward.1} parent=1 // pred_fallthru
      _
    // Predicated region
    $region14: #{_policy_forward.1} parent=1 // pred_check
      _
    $region15: #{_policy_forward.1} parent=1 // pred_check_branch
      %32 = sbr.rel (0) target = $region17
    $region16: #{_policy_forward.1} parent=1 // pred_region
      _
    $region17: #{_policy_forward.1} parent=1 // pred_fallthru
      _
    // Predicated region
    $region18: #{_policy_forward.1} parent=1 // pred_check
      _
    $region19: #{_policy_forward.1} parent=1 // pred_check_branch
      %34 = sbr.rel (0) target = $region21
    $region20: #{_policy_forward.1} parent=1 // pred_region
      %35 = dma.done [#allocation4], 1024
    $region21: #{_policy_forward.1} parent=1 // pred_fallthru
      _
    %v37 = vld [vmem:[%s1] sm:$0xf]
    %v38 = vld [vmem:[#allocation3] sm:$0xf]
    %v39 = vld [vmem:[#allocation3 + $0x4] sm:$0xf]
    %v40 = vld [vmem:[#allocation3 + $0x8] sm:$0xf]
    %v41 = vld [vmem:[#allocation3 + $0xc] sm:$0xf]
    %v42 = vld [vmem:[#allocation3 + $0x10] sm:$0xf]
    %v43 = vld [vmem:[#allocation3 + $0x14] sm:$0xf]
    %v44 = vld [vmem:[#allocation3 + $0x18] sm:$0xf]
    %v45 = vld [vmem:[#allocation3 + $0x1c] sm:$0xf]
    %v46 = vld [vmem:[#allocation3 + $0x20] sm:$0xf]
    %v47 = vld [vmem:[#allocation3 + $0x24] sm:$0xf]
    %v48 = vld [vmem:[#allocation3 + $0x28] sm:$0xf]
    %v49 = vld [vmem:[#allocation3 + $0x2c] sm:$0xf]
    %v50 = vld [vmem:[#allocation3 + $0x30] sm:$0xf]
    %v51 = vld [vmem:[#allocation3 + $0x34] sm:$0xf]
    %v52 = vld [vmem:[#allocation3 + $0x38] sm:$0xf]
    %v53 = vld [vmem:[#allocation3 + $0x3c] sm:$0xf]
    %v54 = vld [vmem:[%s3] sm:$0x1]
    %v56 = vlaneseq
    %v57 = vshrl.u32 %v56, 7
    %v58 = vsub.s32 0, %v57
    %v59 = vrot.slane %v54, %v58
    %v77 = vunpack.c.l.b16 %v38
    %v78 = vunpack.c.l.b16 %v39
    %v79 = vunpack.c.l.b16 %v40
    %v80 = vunpack.c.l.b16 %v41
    %v81 = vunpack.c.l.b16 %v42
    %v82 = vunpack.c.l.b16 %v43
    %v83 = vunpack.c.l.b16 %v44
    %v84 = vunpack.c.l.b16 %v45
    %v85 = vunpack.c.l.b16 %v46
    %v86 = vunpack.c.l.b16 %v47
    %v87 = vunpack.c.l.b16 %v48
    %v88 = vunpack.c.l.b16 %v49
    %v89 = vunpack.c.l.b16 %v50
    %v90 = vunpack.c.l.b16 %v51
    %v91 = vunpack.c.l.b16 %v52
    %v92 = vunpack.c.l.b16 %v53
    %v93 = vpack.c.b16 %v78, %v77
    %v94 = vpack.c.b16 %v80, %v79
    %v95 = vpack.c.b16 %v82, %v81
    %v96 = vpack.c.b16 %v84, %v83
    %v97 = vpack.c.b16 %v86, %v85
    %v98 = vpack.c.b16 %v88, %v87
    %v99 = vpack.c.b16 %v90, %v89
    %v100 = vpack.c.b16 %v92, %v91
    %109 = vmatprep.subr.bf16.mxu0 0
    %110 = vmatpush1.bf16.msra.mxu0 %v100
    %111 = vmatprep.subr.bf16.mxu0 0
    %112 = vmatpush1.bf16.msra.mxu0 %v99
    %113 = vmatprep.subr.bf16.mxu0 0
    %114 = vmatpush1.bf16.msra.mxu0 %v98
    %115 = vmatprep.subr.bf16.mxu0 0
    %116 = vmatpush1.bf16.msra.mxu0 %v97
    %117 = vmatprep.subr.bf16.mxu0 0
    %118 = vmatpush1.bf16.msra.mxu0 %v96
    %119 = vmatprep.subr.bf16.mxu0 0
    %120 = vmatpush1.bf16.msra.mxu0 %v95
    %121 = vmatprep.subr.bf16.mxu0 0
    %122 = vmatpush1.bf16.msra.mxu0 %v94
    %123 = vmatprep.subr.bf16.mxu0 0
    %124 = vmatpush1.bf16.msra.mxu0 %v93
    %125 = vmatprep.subr.bf16.mxu0 0
    %126 = vmatpush2.bf16.msra.mxu0 0
    %127 = vmatprep.subr.bf16.mxu0 0
    %128 = vmatpush2.bf16.msra.mxu0 0
    %129 = vmatprep.subr.bf16.mxu0 0
    %130 = vmatpush2.bf16.msra.mxu0 0
    %131 = vmatprep.subr.bf16.mxu0 0
    %132 = vmatpush2.bf16.msra.mxu0 0
    %133 = vmatprep.subr.bf16.mxu0 0
    %134 = vmatpush2.bf16.msra.mxu0 0
    %135 = vmatprep.subr.bf16.mxu0 0
    %136 = vmatpush2.bf16.msra.mxu0 0
    %137 = vmatprep.subr.bf16.mxu0 0
    %138 = vmatpush2.bf16.msra.mxu0 0
    %139 = vmatprep.subr.bf16.mxu0 0
    %140 = vmatpush2.bf16.msra.mxu0 0
    %141 = vmatprep.mubr.bf16.mxu0 0
    %142 = vmatmul.mubr.bf16.gmra.mxu0 %v37
    %v143 = vpop.f32.mrf.mxu0
    %v144 = vadd.f32 %v59, %v143
    %v145 = vpop.f32.mrf.mxu0
    %v146 = vpop.f32.mrf.mxu0
    %v147 = vpop.f32.mrf.mxu0
    %148 = vdwg.mxu0
    %149 = vst [vmem:[#allocation7] sm:$0xff] %v144
    %v150 = vlaneseq
    %v151 = vshrl.u32 %v150, 7
    %vm152 = vcmp.lt.s32.totalorder %v151, 4
    %v153 = vsel %vm152, %v144, 0.0
    %155 = vrot.lane.b32.xlu0 %v153, 118
    %v156 = vpop.permute.xlu0 %155
    %vm158 = vcmask 7168
    %v159 = vsel %vm158, %v156, 0.0
    %160 = vadd.xlane.f32.xlu0 %v159
    %v161 = vpop.xlane.xlu0 %160
    %v162 = vrot.slane %v161, 4
    %v163 = vadd.f32 %v161, %v162
    %v164 = vrot.slane %v163, 2
    %v165 = vadd.f32 %v163, %v164
    %v166 = vrot.slane %v165, 1
    %v167 = vadd.f32 %v165, %v166
    %s168 = vtos %v167
    %s169 = smul.f32 %s168, 0.25
    %s170 = sld [smem:[#allocation2]]
    %s171 = sadd.f32 %s169, %s170
    %s172 = scalar_lea.smem [#allocation8], 0
    %173 = sst [smem:[%s172]] %s171
    // Predicated region
    $region22: #{_policy_forward.1} parent=1 // pred_check
      _
    $region23: #{_policy_forward.1} parent=1 // pred_check_branch
      %175 = sbr.rel (0) target = $region25
    $region24: #{_policy_forward.1} parent=1 // pred_region
      %s177 = ssub.s32 128, 128
      %178 = vsyncadd [#allocation5], %s177
      %s180 = sshll.u32 [#allocation7], 4
      %s181 = int_to_ptr.vmem [resolvable:$true] %s180
      %183 = dma.vmem_to_hbm [thread:$0]  %s181, 128, %s4, [#allocation5]
    $region25: #{_policy_forward.1} parent=1 // pred_fallthru
      _
    // Predicated region
    $region26: #{_policy_forward.1} parent=1 // pred_check
      _
    $region27: #{_policy_forward.1} parent=1 // pred_check_branch
      %185 = sbr.rel (0) target = $region29
    $region28: #{_policy_forward.1} parent=1 // pred_region
      %s187 = ssub.s32 16, 16
      %188 = vsyncadd [#allocation6], %s187
      %191 = dma.smem_to_hbm [#allocation8], 16, %s5, [#allocation6]
    $region29: #{_policy_forward.1} parent=1 // pred_fallthru
      _
    // Predicated region
    $region30: #{_policy_forward.1} parent=1 // pred_check
      _
    $region31: #{_policy_forward.1} parent=1 // pred_check_branch
      %193 = sbr.rel (0) target = $region33
    $region32: #{_policy_forward.1} parent=1 // pred_region
      %194 = dma.done [#allocation5], 128
    $region33: #{_policy_forward.1} parent=1 // pred_fallthru
      _
    // Predicated region
    $region34: #{_policy_forward.1} parent=1 // pred_check
      _
    $region35: #{_policy_forward.1} parent=1 // pred_check_branch
      %196 = sbr.rel (0) target = $region37
    $region36: #{_policy_forward.1} parent=1 // pred_region
      %197 = dma.done [#allocation6], 16
    $region37: #{_policy_forward.1} parent=1 // pred_fallthru
      _
    %198 = sfence
    %199 = vsyncpa [#allocation4], 1
    %200 = vsyncpa [#allocation5], 1
    %201 = vsyncpa [#allocation6], 1

</llo_original>
